<compile_context>
chip_gen: v5e
topology: v5e:2x2
jax: 0.10.0
libtpu: 0.0.40
codegen_flags: <defaults>
</compile_context>

<pallas_src>
import jax
import jax.numpy as jnp
from jax import lax
from jax.experimental import pallas as pl
from jax.experimental.pallas import tpu as pltpu

LANES = 128
TARGET_BLOCK_BYTES = 1 << 20   # ~1 MiB per input block (knee of the HBM roofline)
NUM_SPLITS_MAX = 2             # leading "parallel" axis -> both TCs on v7x


def _make_kernel(n_rows, block_rows, blocks_per_split, acc_rows, need_mask):
    """Build the kernel with all layout parameters baked in statically."""

    def kernel(p_ref, g_ref, o_ref):
        c = pl.program_id(0)   # parallel split (per-TensorCore on v7x)
        i = pl.program_id(1)   # sequential reduction axis

        @pl.when(i == 0)
        def _():
            o_ref[...] = jnp.zeros_like(o_ref)

        # cast inside the kernel: HBM streams the narrow native dtype
        d = p_ref[...].astype(jnp.float32) - g_ref[...].astype(jnp.float32)
        sq = d * d

        if need_mask:
            # mask rows of partial / clamped-duplicate boundary blocks
            # (Pallas does not guarantee padded block contents).
            blk = c * blocks_per_split + i          # logical, UNclamped index
            row0 = blk * block_rows
            row_ids = row0 + lax.broadcasted_iota(jnp.int32, sq.shape, 0)
            sq = jnp.where(row_ids < n_rows, sq, 0.0)

        if acc_rows == 8:
            # fold the block into a vreg-shaped partial sum: pure VPU adds
            partial = sq.reshape(block_rows // 8, 8, LANES).sum(axis=0)
        else:
            # small odd-sized single-block case
            partial = jnp.sum(sq, axis=0, keepdims=True)

        o_ref[...] += partial   # resident output accumulator (per split)

    return kernel


def mse_loss(pred_v, gt_v):
    """Mean-squared-error with 'mean' reduction, computed in a Pallas kernel."""
    assert pred_v.shape == gt_v.shape, "MSELoss requires matching shapes"
    n_elem = pred_v.size

    p = pred_v.reshape(-1)
    g = gt_v.reshape(-1)

    # Sub-128-element tail handled in plain jnp (tiny) so no full-array pad copy.
    rem = n_elem % LANES
    if rem:
        dt = p[n_elem - rem:].astype(jnp.float32) - g[n_elem - rem:].astype(jnp.float32)
        tail_sum = jnp.sum(dt * dt)
        p = p[: n_elem - rem]
        g = g[: n_elem - rem]
    else:
        tail_sum = jnp.float32(0.0)

    n_main = n_elem - rem
    n_rows = n_main // LANES
    if n_rows == 0:  # tiny input: tail only
        return (tail_sum / jnp.float32(n_elem)).astype(jnp.float32)

    # free (bitcast-equivalent) reshape to a lane-dense slab
    p2 = p.reshape(n_rows, LANES)
    g2 = g.reshape(n_rows, LANES)

    # ~1 MiB blocks regardless of dtype; multiple of 32 rows keeps any packed
    # dtype (bf16/int8/fp8) sublane-tiling happy.
    itemsize = max(jnp.dtype(pred_v.dtype).itemsize, jnp.dtype(gt_v.dtype).itemsize)
    block_rows_default = max(8, (TARGET_BLOCK_BYTES // (LANES * itemsize)) // 32 * 32)

    if n_rows >= block_rows_default:
        block_rows = block_rows_default
    else:
        block_rows = n_rows  # block == full dim (exempt from (8,128) divisibility)

    total_blocks = pl.cdiv(n_rows, block_rows)
    num_splits = NUM_SPLITS_MAX if total_blocks >= NUM_SPLITS_MAX else 1
    blocks_per_split = pl.cdiv(total_blocks, num_splits)

    acc_rows = 8 if block_rows % 8 == 0 else 1
    need_mask = num_splits * blocks_per_split * block_rows > n_rows

    def in_map(c, i):
        # clamp so the DMA never goes out of bounds; duplicated blocks are
        # fully masked inside the kernel via the UNclamped logical index.
        blk = jnp.minimum(c * blocks_per_split + i, total_blocks - 1)
        return (blk, 0)

    kernel = _make_kernel(n_rows, block_rows, blocks_per_split, acc_rows, need_mask)

    partials = pl.pallas_call(
        kernel,
        out_shape=jax.ShapeDtypeStruct((num_splits * acc_rows, LANES), jnp.float32),
        grid_spec=pltpu.PrefetchScalarGridSpec(
            num_scalar_prefetch=0,
            grid=(num_splits, blocks_per_split),
            in_specs=[
                pl.BlockSpec((block_rows, LANES), in_map),
                pl.BlockSpec((block_rows, LANES), in_map),
            ],
            out_specs=pl.BlockSpec((acc_rows, LANES), lambda c, i: (c, 0)),
        ),
        compiler_params=pltpu.CompilerParams(
            dimension_semantics=("parallel", "arbitrary"),
        ),
    )(p2, g2)

    # final (tiny) cross-lane reduce + mean in the wrapper
    total = jnp.sum(partials) + tail_sum
    return (total / jnp.float32(n_elem)).astype(jnp.float32)


if __name__ == "__main__":
    key = jax.random.PRNGKey(0)
    k1, k2 = jax.random.split(key)

    # primary small test consistent with a typical (N, C, H, W) prediction / GT
    pred_v = jax.random.normal(k1, (2, 4, 16, 16), dtype=jnp.float32)
    gt_v = jax.random.normal(k2, (2, 4, 16, 16), dtype=jnp.float32)

    loss = mse_loss(pred_v, gt_v)
    jax.block_until_ready(loss)

    ref = jnp.mean((pred_v - gt_v) ** 2)
    assert jnp.allclose(loss, ref, rtol=1e-6, atol=1e-6), (loss, ref)

    # extra checks exercising the tail / odd-row / split+mask code paths
    for shape in [(2, 3, 37, 41),        # non-128-divisible tail, odd row count
                  (2, 4, 272, 272)]:     # multi-block, 2-way split, masked boundary
        ka, kb = jax.random.split(jax.random.PRNGKey(hash(shape) & 0x7FFFFFFF))
        a = jax.random.normal(ka, shape, dtype=jnp.float32)
        b = jax.random.normal(kb, shape, dtype=jnp.float32)
        got = mse_loss(a, b)
        jax.block_until_ready(got)
        want = jnp.mean((a - b) ** 2)
        assert jnp.allclose(got, want, rtol=1e-5, atol=1e-6), (shape, got, want)

    print("KERNEL_OK")
</pallas_src>

<mosaic_0001>
module attributes {stable_mosaic.version = 11 : i64} {
  func.func @kernel(%arg0: i32, %arg1: i32, %arg2: memref<16x128xf32, #tpu.memory_space<vmem>>, %arg3: memref<16x128xf32, #tpu.memory_space<vmem>>, %arg4: memref<8x128xf32, #tpu.memory_space<vmem>>) attributes {dimension_semantics = [#tpu.dimension_semantics<parallel>, #tpu.dimension_semantics<arbitrary>], iteration_bounds = array<i64: 1, 1>, scalar_prefetch = 0 : i64, scratch_operands = 0 : i64, tpu.core_type = #tpu.core_type<tc>, window_params = [{transform_indices = @transform_0, window_bounds = array<i64: 16, 128>}, {transform_indices = @transform_1, window_bounds = array<i64: 16, 128>}, {transform_indices = @transform_2, window_bounds = array<i64: 8, 128>}]} {
    %c0_i32 = arith.constant 0 : i32
    %0 = arith.cmpi eq, %arg1, %c0_i32 : i32
    %1 = arith.extui %0 : i1 to i32
    %c0_i32_0 = arith.constant 0 : i32
    %2 = arith.cmpi ne, %1, %c0_i32_0 : i32
    scf.if %2 {
      %cst_8 = arith.constant 0.000000e+00 : f32
      %12 = vector.broadcast %cst_8 : f32 to vector<8x128xf32>
      %c0_9 = arith.constant 0 : index
      %c0_10 = arith.constant 0 : index
      %13 = vector.load %arg4[%c0_9, %c0_10] : memref<8x128xf32, #tpu.memory_space<vmem>>, vector<8x128xf32>
      tpu.vector_store %arg4[%c0_9, %c0_10], %12 {strides = array<i32>} : memref<8x128xf32, #tpu.memory_space<vmem>>, vector<8x128xf32>,
    } else {
    }
    %c0 = arith.constant 0 : index
    %c0_1 = arith.constant 0 : index
    %3 = vector.load %arg2[%c0, %c0_1] : memref<16x128xf32, #tpu.memory_space<vmem>>, vector<16x128xf32>
    %c0_2 = arith.constant 0 : index
    %c0_3 = arith.constant 0 : index
    %4 = vector.load %arg3[%c0_2, %c0_3] : memref<16x128xf32, #tpu.memory_space<vmem>>, vector<16x128xf32>
    %5 = arith.subf %3, %4 : vector<16x128xf32>
    %6 = arith.mulf %5, %5 : vector<16x128xf32>
    %7 = vector.shape_cast %6 : vector<16x128xf32> to vector<2x8x128xf32>
    %cst = arith.constant dense<0.000000e+00> : vector<8x128xf32>
    %8 = vector.multi_reduction <add>, %7, %cst [0] : vector<2x8x128xf32> to vector<8x128xf32>
    %c0_4 = arith.constant 0 : index
    %c0_5 = arith.constant 0 : index
    %9 = vector.load %arg4[%c0_4, %c0_5] : memref<8x128xf32, #tpu.memory_space<vmem>>, vector<8x128xf32>
    %10 = arith.addf %9, %8 : vector<8x128xf32>
    %c0_6 = arith.constant 0 : index
    %c0_7 = arith.constant 0 : index
    %11 = vector.load %arg4[%c0_6, %c0_7] : memref<8x128xf32, #tpu.memory_space<vmem>>, vector<8x128xf32>
    tpu.vector_store %arg4[%c0_6, %c0_7], %10 {strides = array<i32>} : memref<8x128xf32, #tpu.memory_space<vmem>>, vector<8x128xf32>,
    return
  }
  func.func @transform_0(%arg0: i32, %arg1: i32) -> (i32, i32) {
    %c1_i32 = arith.constant 1 : i32
    %0 = arith.muli %arg0, %c1_i32 : i32
    %1 = arith.addi %0, %arg1 : i32
    %c0_i32 = arith.constant 0 : i32
    %2 = arith.minsi %1, %c0_i32 : i32
    %c0_i32_0 = arith.constant 0 : i32
    %c0_i32_1 = arith.constant 0 : i32
    return %2, %c0_i32_0 : i32, i32
  }
  func.func @transform_1(%arg0: i32, %arg1: i32) -> (i32, i32) {
    %c1_i32 = arith.constant 1 : i32
    %0 = arith.muli %arg0, %c1_i32 : i32
    %1 = arith.addi %0, %arg1 : i32
    %c0_i32 = arith.constant 0 : i32
    %2 = arith.minsi %1, %c0_i32 : i32
    %c0_i32_0 = arith.constant 0 : i32
    %c0_i32_1 = arith.constant 0 : i32
    return %2, %c0_i32_0 : i32, i32
  }
  func.func @transform_2(%arg0: i32, %arg1: i32) -> (i32, i32) {
    %c0_i32 = arith.constant 0 : i32
    %c0_i32_0 = arith.constant 0 : i32
    return %arg0, %c0_i32 : i32, i32
  }
}

</mosaic_0001>

<llo_original>
// kernel: tpu_custom_call.1
$region0: #{tpu_custom_call.1}
  #allocation0 [shape = 'u32[]', space=smem, size = 0x4, offset = 0x4, fixed_abs, tag = 'smem constant byte address 0x4 - core index']
  #allocation1 [shape = 'u32[72,128]{1,0:T(1,128)}', space=vmem, size = 0x9000, scoped, tag = 'internal scratch']
  %s0 = inlined_call_operand.hbm [shape: f32[16,128], index: 0, kind: input, shape index: {}]
  %s1 = inlined_call_operand.hbm [shape: f32[16,128], index: 1, kind: input, shape index: {}]
  %s2 = inlined_call_operand.hbm [shape: f32[8,128], index: 2, kind: output, shape index: {}]
  %s3 = sld [smem:[#allocation0]]
  $region30: #{tpu_custom_call.1} parent=0
    _
  %s5 = ssub.s32 1, %s3
  %s6 = scalar_select 0, %s5, %s3
  $region1: #{tpu_custom_call.1} parent=0
    #allocation2 [shape = 'u8[8192]{0}', space=vmem, size = 0x2000, scoped, tag = 'input window, operand 0, single buffered']
    #allocation3 [shape = 's32[1]{0}', space=sflag, size = 0x4, scoped, tag = 'scoped memory for tpu_custom_call.1']
    #allocation4 [shape = 's32[1]{0}', space=sflag, size = 0x4, scoped, tag = 'scoped memory for tpu_custom_call.1']
    #allocation5 [shape = 'u8[8192]{0}', space=vmem, size = 0x2000, scoped, tag = 'input window, operand 1, single buffered']
    #allocation6 [shape = 's32[1]{0}', space=sflag, size = 0x4, scoped, tag = 'scoped memory for tpu_custom_call.1']
    #allocation7 [shape = 'u8[4096]{0}', space=vmem, size = 0x1000, scoped, tag = 'output window, operand 0, single buffered']
    %7 = vsyncpa [#allocation3], 0
    %8 = vsyncpa [#allocation6], 0
    %9 = vsyncpa [#allocation4], 0
    // Predicated region
    $region2: #{tpu_custom_call.1} parent=1 // pred_check
      _
    $region3: #{tpu_custom_call.1} parent=1 // pred_check_branch
      %11 = sbr.rel (0) target = $region5
    $region4: #{tpu_custom_call.1} parent=1 // pred_region
      %s12 = sadd.s32 0, 0
      %p13 = scmp.lt.s32.totalorder %s12, 0
      %s14 = scalar_select %p13, %s12, 0
      %s15 = smul.u32 2, %s14
      %17 = vsyncadd [#allocation3], 0
      %s18 = smul.addr %s15, 8
      %s19 = scalar_lea.hbm %s0, %s18
      %s20 = sshll.u32 %s19, 4
      %s21 = int_to_ptr.hbm [resolvable:$true] %s20
      %s22 = sshll.u32 [#allocation2], 4
      %s23 = int_to_ptr.vmem [resolvable:$true] %s22
      %28 = dma.hbm_to_vmem [thread:$0]  %s21, 256, %s23, [#allocation3], 128, 128, 8
    $region5: #{tpu_custom_call.1} parent=1 // pred_fallthru
      _
    // Predicated region
    $region6: #{tpu_custom_call.1} parent=1 // pred_check
      _
    $region7: #{tpu_custom_call.1} parent=1 // pred_check_branch
      %30 = sbr.rel (0) target = $region9
    $region8: #{tpu_custom_call.1} parent=1 // pred_region
      %s31 = sadd.s32 0, 0
      %p32 = scmp.lt.s32.totalorder %s31, 0
      %s33 = scalar_select %p32, %s31, 0
      %s34 = smul.u32 2, %s33
      %36 = vsyncadd [#allocation6], 0
      %s37 = smul.addr %s34, 8
      %s38 = scalar_lea.hbm %s1, %s37
      %s39 = sshll.u32 %s38, 4
      %s40 = int_to_ptr.hbm [resolvable:$true] %s39
      %s41 = sshll.u32 [#allocation5], 4
      %s42 = int_to_ptr.vmem [resolvable:$true] %s41
      %47 = dma.hbm_to_vmem [thread:$0]  %s40, 256, %s42, [#allocation6], 128, 128, 8
    $region9: #{tpu_custom_call.1} parent=1 // pred_fallthru
      _
    // Predicated region
    $region10: #{tpu_custom_call.1} parent=1 // pred_check
      _
    $region11: #{tpu_custom_call.1} parent=1 // pred_check_branch
      %49 = sbr.rel (0) target = $region13
    $region12: #{tpu_custom_call.1} parent=1 // pred_region
      %51 = dma.done [#allocation3], 256
    $region13: #{tpu_custom_call.1} parent=1 // pred_fallthru
      _
    // Predicated region
    $region14: #{tpu_custom_call.1} parent=1 // pred_check
      _
    $region15: #{tpu_custom_call.1} parent=1 // pred_check_branch
      %53 = sbr.rel (0) target = $region17
    $region16: #{tpu_custom_call.1} parent=1 // pred_region
      %55 = dma.done [#allocation6], 256
    $region17: #{tpu_custom_call.1} parent=1 // pred_fallthru
      _
    %s56 = sadd.s32 0, 0
    %p57 = scmp.lt.s32.totalorder %s56, 0
    %s58 = scalar_select %p57, %s56, 0
    %s59 = smul.u32 2, %s58
    %s60 = sadd.s32 0, 0
    %p61 = scmp.lt.s32.totalorder %s60, 0
    %s62 = scalar_select %p61, %s60, 0
    %s63 = smul.u32 2, %s62
    %p64 = scmp.eq.s32.totalorder 0, 0
    // Predicated region
    $region18: #{tpu_custom_call.1} parent=1 // pred_check
      %p65 = pneg %p64
    $region19: #{tpu_custom_call.1} parent=1 // pred_check_branch
      %67 = sbr.rel (%p65) target = $region21
    $region20: #{tpu_custom_call.1} parent=1 // pred_region
      %68 = vst [vmem:[#allocation7] sm:$0xff] 0.0
    $region21: #{tpu_custom_call.1} parent=1 // pred_fallthru
      _
    %v69 = vld [vmem:[#allocation2] sm:$0xff]
    %v70 = vld [vmem:[#allocation2 + $0x8] sm:$0xff]
    %v71 = vld [vmem:[#allocation5] sm:$0xff]
    %v72 = vld [vmem:[#allocation5 + $0x8] sm:$0xff]
    %v73 = vsub.f32 %v69, %v71
    %v74 = vsub.f32 %v70, %v72
    %v75 = vmul.f32 %v73, %v73
    %v76 = vmul.f32 %v74, %v74
    %v77 = vadd.f32 %v75, %v76
    %v78 = vld [vmem:[#allocation7] sm:$0xff]
    %v79 = vadd.f32 %v78, %v77
    %80 = vst [vmem:[#allocation7] sm:$0xff] %v79
    // Predicated region
    $region22: #{tpu_custom_call.1} parent=1 // pred_check
      _
    $region23: #{tpu_custom_call.1} parent=1 // pred_check_branch
      %82 = sbr.rel (0) target = $region25
    $region24: #{tpu_custom_call.1} parent=1 // pred_region
      %84 = vsyncadd [#allocation4], 0
      %s86 = sshll.u32 [#allocation7], 4
      %s87 = int_to_ptr.vmem [resolvable:$true] %s86
      %s88 = sshll.u32 %s2, 4
      %s89 = int_to_ptr.hbm [resolvable:$true] %s88
      %91 = dma.vmem_to_hbm [thread:$0]  %s87, 128, %s89, [#allocation4]
    $region25: #{tpu_custom_call.1} parent=1 // pred_fallthru
      _
    // Predicated region
    $region26: #{tpu_custom_call.1} parent=1 // pred_check
      _
    $region27: #{tpu_custom_call.1} parent=1 // pred_check_branch
      %93 = sbr.rel (0) target = $region29
    $region28: #{tpu_custom_call.1} parent=1 // pred_region
      %95 = dma.done [#allocation4], 128
    $region29: #{tpu_custom_call.1} parent=1 // pred_fallthru
      _
    %96 = vsyncpa [#allocation3], 1
    %97 = vsyncpa [#allocation6], 1
    %98 = vsyncpa [#allocation4], 1

</llo_original>
